<compile_context>
chip_gen: v5e
topology: v5e:2x2
jax: 0.10.0
libtpu: 0.0.40
codegen_flags: <defaults>
</compile_context>

<pallas_src>
import functools

import jax
import jax.numpy as jnp
from jax.experimental import pallas as pl
from jax.experimental.pallas import tpu as pltpu


# ---------------------------------------------------------------------------
# Fused Pallas kernel: projections + attention + head merge + output Linear
# ---------------------------------------------------------------------------

def _fused_cross_attn_kernel(x1_ref, x2_ref, wqv_ref, wk_ref, wo_ref, bo_ref,
                             o_ref, *, heads, dim_head, scale):
    # Per grid step (one batch element):
    #   x1_ref/x2_ref: (1, N, D)   wqv_ref: (D, 2*inner)   wk_ref: (D, inner)
    #   wo_ref: (inner, D)         bo_ref: (1, D)          o_ref: (1, N, D)
    x1 = x1_ref[0].astype(jnp.float32)                     # (N, D)
    x2 = x2_ref[0].astype(jnp.float32)                     # (N, D)

    inner = heads * dim_head

    # Fused q/v projection (single MXU pass over the concatenated weight) and
    # the algebraically simplified key difference: k1 - k2 = (x1 - x2) @ Wk.
    qv = jnp.dot(x1, wqv_ref[...].astype(jnp.float32),
                 preferred_element_type=jnp.float32)       # (N, 2*inner)
    kd = jnp.dot(x1 - x2, wk_ref[...].astype(jnp.float32),
                 preferred_element_type=jnp.float32)       # (N, inner)

    q = qv[:, :inner]                                      # (N, inner)
    v = qv[:, inner:]                                      # (N, inner)
    wo = wo_ref[...].astype(jnp.float32)                   # (inner, D)

    # Head merge + output Linear folded into a per-head accumulation:
    #   y = bias + sum_h (attn_h @ v_h) @ Wo[h*Dh:(h+1)*Dh, :]
    y = bo_ref[...].astype(jnp.float32)                    # (1, D), broadcasts
    for h in range(heads):                                 # static unroll
        lo, hi = h * dim_head, (h + 1) * dim_head
        qh = q[:, lo:hi]                                   # (N, Dh)
        kdh = kd[:, lo:hi]                                 # (N, Dh)
        vh = v[:, lo:hi]                                   # (N, Dh)

        s = jnp.dot(qh, kdh.T, preferred_element_type=jnp.float32)  # (N, N)
        s = (s * s) * scale
        s = s - jnp.max(s, axis=-1, keepdims=True)         # stable softmax
        p = jnp.exp(s)
        inv_l = pl.reciprocal(jnp.sum(p, axis=-1, keepdims=True), approx=True)

        oh = jnp.dot(p, vh, preferred_element_type=jnp.float32) * inv_l  # (N, Dh)
        y = y + jnp.dot(oh, wo[lo:hi, :], preferred_element_type=jnp.float32)

    o_ref[0] = y.astype(o_ref.dtype)


# ---------------------------------------------------------------------------
# Wrapper
# ---------------------------------------------------------------------------

def cross_attention_forward(x1, x2, params, heads):
    """Full Cross_Attention.forward (mask=None, eval-mode dropout)."""
    b, n, dim = x1.shape
    Wq, Wk, Wv, Wo, bo = params      # Wq/Wk/Wv: (dim, inner), Wo: (inner, dim), bo: (1, dim)
    inner = Wq.shape[1]
    dim_head = inner // heads
    scale = float(dim) ** (-0.5)

    # One-time weight prep: concatenate the two projections applied to x1.
    Wqv = jnp.concatenate([Wq, Wv], axis=1)                # (dim, 2*inner)

    kern = functools.partial(_fused_cross_attn_kernel,
                             heads=heads, dim_head=dim_head, scale=scale)

    x_spec = pl.BlockSpec((1, n, dim), lambda i: (i, 0, 0))

    def full_spec(shape):
        return pl.BlockSpec(shape, lambda i, _s=shape: tuple(0 for _ in _s))

    return pl.pallas_call(
        kern,
        out_shape=jax.ShapeDtypeStruct((b, n, dim), x1.dtype),
        grid=(b,),
        in_specs=[x_spec, x_spec,
                  full_spec(Wqv.shape), full_spec(Wk.shape),
                  full_spec(Wo.shape), full_spec(bo.shape)],
        out_specs=x_spec,
        compiler_params=pltpu.CompilerParams(dimension_semantics=("parallel",)),
    )(x1, x2, Wqv, Wk, Wo, bo)


# ---------------------------------------------------------------------------
# Pure-JAX reference (for verification)
# ---------------------------------------------------------------------------

def reference_forward(x1, x2, params, heads):
    b, n, dim = x1.shape
    Wq, Wk, Wv, Wo, bo = params
    inner = Wq.shape[1]
    dh = inner // heads
    scale = float(dim) ** (-0.5)

    def proj(x, W):
        return jnp.einsum('bnd,de->bne', x, W)

    def split(t):
        return t.reshape(b, n, heads, dh).transpose(0, 2, 1, 3)

    q1 = split(proj(x1, Wq))
    k1 = split(proj(x1, Wk))
    v1 = split(proj(x1, Wv))
    k2 = split(proj(x2, Wk))

    dots = jnp.einsum('bhnd,bhmd->bhnm', q1, k1 - k2)
    dots = (dots ** 2) * scale
    attn = jax.nn.softmax(dots, axis=-1)
    out = jnp.einsum('bhnm,bhmd->bhnd', attn, v1)
    out = out.transpose(0, 2, 1, 3).reshape(b, n, inner)
    return jnp.einsum('bne,ed->bnd', out, Wo) + bo.reshape(1, 1, -1)


# ---------------------------------------------------------------------------
# Main
# ---------------------------------------------------------------------------

if __name__ == "__main__":
    # Small shapes consistent with the module.
    B, N, DIM = 2, 8, 32
    HEADS, DIM_HEAD = 2, 16
    INNER = HEADS * DIM_HEAD  # 32

    key = jax.random.PRNGKey(0)
    k_x1, k_x2, k_wq, k_wk, k_wv, k_wo, k_bo = jax.random.split(key, 7)

    x1 = jax.random.normal(k_x1, (B, N, DIM), dtype=jnp.float32)
    x2 = jax.random.normal(k_x2, (B, N, DIM), dtype=jnp.float32)

    # Deterministic synthetic parameters (PyTorch Linear stores W as (out, in);
    # here we store them pre-transposed as (in, out) so y = x @ W).
    Wq = 0.05 * jax.random.normal(k_wq, (DIM, INNER), dtype=jnp.float32)
    Wk = 0.05 * jax.random.normal(k_wk, (DIM, INNER), dtype=jnp.float32)
    Wv = 0.05 * jax.random.normal(k_wv, (DIM, INNER), dtype=jnp.float32)
    Wo = 0.05 * jax.random.normal(k_wo, (INNER, DIM), dtype=jnp.float32)
    bo = 0.05 * jax.random.normal(k_bo, (1, DIM), dtype=jnp.float32)
    params = (Wq, Wk, Wv, Wo, bo)

    out = cross_attention_forward(x1, x2, params, HEADS)
    out = jax.block_until_ready(out)

    ref = jax.block_until_ready(reference_forward(x1, x2, params, HEADS))

    assert out.shape == (B, N, DIM), out.shape
    max_err = float(jnp.max(jnp.abs(out - ref)))
    assert jnp.allclose(out, ref, atol=1e-3, rtol=1e-3), max_err

    print("KERNEL_OK")
</pallas_src>

<mosaic_0001>
module attributes {stable_mosaic.version = 11 : i64} {
  func.func @_fused_cross_attn_kernel(%arg0: i32, %arg1: memref<1x8x32xf32, #tpu.memory_space<vmem>>, %arg2: memref<1x8x32xf32, #tpu.memory_space<vmem>>, %arg3: memref<32x64xf32, #tpu.memory_space<vmem>>, %arg4: memref<32x32xf32, #tpu.memory_space<vmem>>, %arg5: memref<32x32xf32, #tpu.memory_space<vmem>>, %arg6: memref<1x32xf32, #tpu.memory_space<vmem>>, %arg7: memref<1x8x32xf32, #tpu.memory_space<vmem>>) attributes {dimension_semantics = [#tpu.dimension_semantics<parallel>], iteration_bounds = array<i64: 2>, scalar_prefetch = 0 : i64, scratch_operands = 0 : i64, tpu.core_type = #tpu.core_type<tc>, window_params = [{transform_indices = @transform_0, window_bounds = array<i64: 1, 8, 32>}, {transform_indices = @transform_1, window_bounds = array<i64: 1, 8, 32>}, {pipeline_mode = #tpu.pipeline_mode<synchronous>, transform_indices = @transform_2, window_bounds = array<i64: 32, 64>}, {pipeline_mode = #tpu.pipeline_mode<synchronous>, transform_indices = @transform_3, window_bounds = array<i64: 32, 32>}, {pipeline_mode = #tpu.pipeline_mode<synchronous>, transform_indices = @transform_4, window_bounds = array<i64: 32, 32>}, {pipeline_mode = #tpu.pipeline_mode<synchronous>, transform_indices = @transform_5, window_bounds = array<i64: 1, 32>}, {transform_indices = @transform_6, window_bounds = array<i64: 1, 8, 32>}]} {
    %c0 = arith.constant 0 : index
    %c0_0 = arith.constant 0 : index
    %c0_1 = arith.constant 0 : index
    %0 = vector.load %arg1[%c0, %c0_0, %c0_1] : memref<1x8x32xf32, #tpu.memory_space<vmem>>, vector<1x8x32xf32>
    %1 = vector.shape_cast %0 : vector<1x8x32xf32> to vector<8x32xf32>
    %c0_2 = arith.constant 0 : index
    %c0_3 = arith.constant 0 : index
    %c0_4 = arith.constant 0 : index
    %2 = vector.load %arg2[%c0_2, %c0_3, %c0_4] : memref<1x8x32xf32, #tpu.memory_space<vmem>>, vector<1x8x32xf32>
    %3 = vector.shape_cast %2 : vector<1x8x32xf32> to vector<8x32xf32>
    %c0_5 = arith.constant 0 : index
    %c0_6 = arith.constant 0 : index
    %4 = vector.load %arg3[%c0_5, %c0_6] : memref<32x64xf32, #tpu.memory_space<vmem>>, vector<32x64xf32>
    %cst = arith.constant dense<0.000000e+00> : vector<8x64xf32>
    %5 = tpu.matmul %1, %4, %cst {dimension_numbers = #tpu.dot_dimension_numbers<[1], [0], [0], [1], [0, 0, 1, 1], [], []>} : vector<8x32xf32>, vector<32x64xf32>, vector<8x64xf32> -> vector<8x64xf32>
    %6 = arith.subf %1, %3 : vector<8x32xf32>
    %c0_7 = arith.constant 0 : index
    %c0_8 = arith.constant 0 : index
    %7 = vector.load %arg4[%c0_7, %c0_8] : memref<32x32xf32, #tpu.memory_space<vmem>>, vector<32x32xf32>
    %cst_9 = arith.constant dense<0.000000e+00> : vector<8x32xf32>
    %8 = tpu.matmul %6, %7, %cst_9 {dimension_numbers = #tpu.dot_dimension_numbers<[1], [0], [0], [1], [0, 0, 1, 1], [], []>} : vector<8x32xf32>, vector<32x32xf32>, vector<8x32xf32> -> vector<8x32xf32>
    %9 = vector.extract_strided_slice %5 {offsets = [0, 0], sizes = [8, 32], strides = [1, 1]} : vector<8x64xf32> to vector<8x32xf32>
    %10 = vector.extract_strided_slice %5 {offsets = [0, 32], sizes = [8, 32], strides = [1, 1]} : vector<8x64xf32> to vector<8x32xf32>
    %c0_10 = arith.constant 0 : index
    %c0_11 = arith.constant 0 : index
    %11 = vector.load %arg5[%c0_10, %c0_11] : memref<32x32xf32, #tpu.memory_space<vmem>>, vector<32x32xf32>
    %c0_12 = arith.constant 0 : index
    %c0_13 = arith.constant 0 : index
    %12 = vector.load %arg6[%c0_12, %c0_13] : memref<1x32xf32, #tpu.memory_space<vmem>>, vector<1x32xf32>
    %13 = vector.extract_strided_slice %9 {offsets = [0, 0], sizes = [8, 16], strides = [1, 1]} : vector<8x32xf32> to vector<8x16xf32>
    %14 = vector.extract_strided_slice %8 {offsets = [0, 0], sizes = [8, 16], strides = [1, 1]} : vector<8x32xf32> to vector<8x16xf32>
    %15 = vector.extract_strided_slice %10 {offsets = [0, 0], sizes = [8, 16], strides = [1, 1]} : vector<8x32xf32> to vector<8x16xf32>
    %16 = tpu.transpose %14, [1, 0] : vector<8x16xf32> -> vector<16x8xf32>
    %cst_14 = arith.constant dense<0.000000e+00> : vector<8x8xf32>
    %17 = tpu.matmul %13, %16, %cst_14 {dimension_numbers = #tpu.dot_dimension_numbers<[1], [0], [0], [1], [0, 0, 1, 1], [], []>} : vector<8x16xf32>, vector<16x8xf32>, vector<8x8xf32> -> vector<8x8xf32>
    %18 = arith.mulf %17, %17 : vector<8x8xf32>
    %cst_15 = arith.constant 0.176776692 : f32
    %19 = vector.broadcast %cst_15 : f32 to vector<8x8xf32>
    %20 = arith.mulf %18, %19 : vector<8x8xf32>
    %cst_16 = arith.constant dense<0xFF800000> : vector<8xf32>
    %21 = vector.multi_reduction <maximumf>, %20, %cst_16 [1] : vector<8x8xf32> to vector<8xf32>
    %22 = vector.shape_cast %21 : vector<8xf32> to vector<8x1xf32>
    %23 = vector.broadcast %22 : vector<8x1xf32> to vector<8x8xf32>
    %24 = arith.subf %20, %23 : vector<8x8xf32>
    %25 = math.exp %24 : vector<8x8xf32>
    %cst_17 = arith.constant dense<0.000000e+00> : vector<8xf32>
    %26 = vector.multi_reduction <add>, %25, %cst_17 [1] : vector<8x8xf32> to vector<8xf32>
    %27 = vector.shape_cast %26 : vector<8xf32> to vector<8x1xf32>
    %28 = tpu.reciprocal %27 {approx = true} : vector<8x1xf32> -> vector<8x1xf32>
    %cst_18 = arith.constant dense<0.000000e+00> : vector<8x16xf32>
    %29 = tpu.matmul %25, %15, %cst_18 {dimension_numbers = #tpu.dot_dimension_numbers<[1], [0], [0], [1], [0, 0, 1, 1], [], []>} : vector<8x8xf32>, vector<8x16xf32>, vector<8x16xf32> -> vector<8x16xf32>
    %30 = vector.broadcast %28 : vector<8x1xf32> to vector<8x16xf32>
    %31 = arith.mulf %29, %30 : vector<8x16xf32>
    %32 = vector.extract_strided_slice %11 {offsets = [0, 0], sizes = [16, 32], strides = [1, 1]} : vector<32x32xf32> to vector<16x32xf32>
    %cst_19 = arith.constant dense<0.000000e+00> : vector<8x32xf32>
    %33 = tpu.matmul %31, %32, %cst_19 {dimension_numbers = #tpu.dot_dimension_numbers<[1], [0], [0], [1], [0, 0, 1, 1], [], []>} : vector<8x16xf32>, vector<16x32xf32>, vector<8x32xf32> -> vector<8x32xf32>
    %34 = vector.broadcast %12 : vector<1x32xf32> to vector<8x32xf32>
    %35 = arith.addf %34, %33 : vector<8x32xf32>
    %36 = vector.extract_strided_slice %9 {offsets = [0, 16], sizes = [8, 16], strides = [1, 1]} : vector<8x32xf32> to vector<8x16xf32>
    %37 = vector.extract_strided_slice %8 {offsets = [0, 16], sizes = [8, 16], strides = [1, 1]} : vector<8x32xf32> to vector<8x16xf32>
    %38 = vector.extract_strided_slice %10 {offsets = [0, 16], sizes = [8, 16], strides = [1, 1]} : vector<8x32xf32> to vector<8x16xf32>
    %39 = tpu.transpose %37, [1, 0] : vector<8x16xf32> -> vector<16x8xf32>
    %cst_20 = arith.constant dense<0.000000e+00> : vector<8x8xf32>
    %40 = tpu.matmul %36, %39, %cst_20 {dimension_numbers = #tpu.dot_dimension_numbers<[1], [0], [0], [1], [0, 0, 1, 1], [], []>} : vector<8x16xf32>, vector<16x8xf32>, vector<8x8xf32> -> vector<8x8xf32>
    %41 = arith.mulf %40, %40 : vector<8x8xf32>
    %cst_21 = arith.constant 0.176776692 : f32
    %42 = vector.broadcast %cst_21 : f32 to vector<8x8xf32>
    %43 = arith.mulf %41, %42 : vector<8x8xf32>
    %cst_22 = arith.constant dense<0xFF800000> : vector<8xf32>
    %44 = vector.multi_reduction <maximumf>, %43, %cst_22 [1] : vector<8x8xf32> to vector<8xf32>
    %45 = vector.shape_cast %44 : vector<8xf32> to vector<8x1xf32>
    %46 = vector.broadcast %45 : vector<8x1xf32> to vector<8x8xf32>
    %47 = arith.subf %43, %46 : vector<8x8xf32>
    %48 = math.exp %47 : vector<8x8xf32>
    %cst_23 = arith.constant dense<0.000000e+00> : vector<8xf32>
    %49 = vector.multi_reduction <add>, %48, %cst_23 [1] : vector<8x8xf32> to vector<8xf32>
    %50 = vector.shape_cast %49 : vector<8xf32> to vector<8x1xf32>
    %51 = tpu.reciprocal %50 {approx = true} : vector<8x1xf32> -> vector<8x1xf32>
    %cst_24 = arith.constant dense<0.000000e+00> : vector<8x16xf32>
    %52 = tpu.matmul %48, %38, %cst_24 {dimension_numbers = #tpu.dot_dimension_numbers<[1], [0], [0], [1], [0, 0, 1, 1], [], []>} : vector<8x8xf32>, vector<8x16xf32>, vector<8x16xf32> -> vector<8x16xf32>
    %53 = vector.broadcast %51 : vector<8x1xf32> to vector<8x16xf32>
    %54 = arith.mulf %52, %53 : vector<8x16xf32>
    %55 = vector.extract_strided_slice %11 {offsets = [16, 0], sizes = [16, 32], strides = [1, 1]} : vector<32x32xf32> to vector<16x32xf32>
    %cst_25 = arith.constant dense<0.000000e+00> : vector<8x32xf32>
    %56 = tpu.matmul %54, %55, %cst_25 {dimension_numbers = #tpu.dot_dimension_numbers<[1], [0], [0], [1], [0, 0, 1, 1], [], []>} : vector<8x16xf32>, vector<16x32xf32>, vector<8x32xf32> -> vector<8x32xf32>
    %57 = arith.addf %35, %56 : vector<8x32xf32>
    %c0_26 = arith.constant 0 : index
    %c0_27 = arith.constant 0 : index
    %c0_28 = arith.constant 0 : index
    %58 = vector.load %arg7[%c0_26, %c0_27, %c0_28] : memref<1x8x32xf32, #tpu.memory_space<vmem>>, vector<1x8x32xf32>
    %59 = vector.shape_cast %58 : vector<1x8x32xf32> to vector<8x32xf32>
    %60 = vector.shape_cast %57 : vector<8x32xf32> to vector<1x8x32xf32>
    tpu.vector_store %arg7[%c0_26, %c0_27, %c0_28], %60 {strides = array<i32>} : memref<1x8x32xf32, #tpu.memory_space<vmem>>, vector<1x8x32xf32>,
    return
  }
  func.func @transform_0(%arg0: i32) -> (i32, i32, i32) {
    %c0_i32 = arith.constant 0 : i32
    %c0_i32_0 = arith.constant 0 : i32
    %c0_i32_1 = arith.constant 0 : i32
    return %arg0, %c0_i32, %c0_i32_0 : i32, i32, i32
  }
  func.func @transform_1(%arg0: i32) -> (i32, i32, i32) {
    %c0_i32 = arith.constant 0 : i32
    %c0_i32_0 = arith.constant 0 : i32
    %c0_i32_1 = arith.constant 0 : i32
    return %arg0, %c0_i32, %c0_i32_0 : i32, i32, i32
  }
  func.func @transform_2(%arg0: i32) -> (i32, i32) {
    %c0_i32 = arith.constant 0 : i32
    %c0_i32_0 = arith.constant 0 : i32
    %c0_i32_1 = arith.constant 0 : i32
    return %c0_i32, %c0_i32_0 : i32, i32
  }
  func.func @transform_3(%arg0: i32) -> (i32, i32) {
    %c0_i32 = arith.constant 0 : i32
    %c0_i32_0 = arith.constant 0 : i32
    %c0_i32_1 = arith.constant 0 : i32
    return %c0_i32, %c0_i32_0 : i32, i32
  }
  func.func @transform_4(%arg0: i32) -> (i32, i32) {
    %c0_i32 = arith.constant 0 : i32
    %c0_i32_0 = arith.constant 0 : i32
    %c0_i32_1 = arith.constant 0 : i32
    return %c0_i32, %c0_i32_0 : i32, i32
  }
  func.func @transform_5(%arg0: i32) -> (i32, i32) {
    %c0_i32 = arith.constant 0 : i32
    %c0_i32_0 = arith.constant 0 : i32
    %c0_i32_1 = arith.constant 0 : i32
    return %c0_i32, %c0_i32_0 : i32, i32
  }
  func.func @transform_6(%arg0: i32) -> (i32, i32, i32) {
    %c0_i32 = arith.constant 0 : i32
    %c0_i32_0 = arith.constant 0 : i32
    %c0_i32_1 = arith.constant 0 : i32
    return %arg0, %c0_i32, %c0_i32_0 : i32, i32, i32
  }
}

</mosaic_0001>

<llo_original>
// kernel: tpu_custom_call.1
$region0: #{tpu_custom_call.1}
  #allocation0 [shape = 'u32[]', space=smem, size = 0x4, offset = 0x4, fixed_abs, tag = 'smem constant byte address 0x4 - core index']
  #allocation1 [shape = 'u32[72,128]{1,0:T(1,128)}', space=vmem, size = 0x9000, scoped, tag = 'internal scratch']
  %s0 = inlined_call_operand.hbm [shape: f32[2,8,32], index: 0, kind: input, shape index: {}]
  %s1 = inlined_call_operand.hbm [shape: f32[2,8,32], index: 1, kind: input, shape index: {}]
  %s2 = inlined_call_operand.hbm [shape: f32[32,64], index: 2, kind: input, shape index: {}]
  %s3 = inlined_call_operand.hbm [shape: f32[32,32], index: 3, kind: input, shape index: {}]
  %s4 = inlined_call_operand.hbm [shape: f32[32,32], index: 4, kind: input, shape index: {}]
  %s5 = inlined_call_operand.vmem [shape: f32[1,32], index: 5, kind: input, shape index: {}]
  %s6 = inlined_call_operand.hbm [shape: f32[2,8,32], index: 6, kind: output, shape index: {}]
  %s7 = sld [smem:[#allocation0]]
  $region77: #{tpu_custom_call.1} parent=0
    _
  %s9 = ssub.s32 1, %s7
  %s10 = scalar_select 0, %s9, %s7
  $region1: #{tpu_custom_call.1} parent=0
    #allocation2 [shape = 'u8[8192]{0}', space=vmem, size = 0x2000, scoped, tag = 'input window, operand 0']
    #allocation3 [shape = 's32[2]{0}', space=sflag, size = 0x8, scoped, tag = 'scoped memory for tpu_custom_call.1']
    #allocation4 [shape = 's32[2]{0}', space=sflag, size = 0x8, scoped, tag = 'scoped memory for tpu_custom_call.1']
    #allocation5 [shape = 'u8[8192]{0}', space=vmem, size = 0x2000, scoped, tag = 'input window, operand 1']
    #allocation6 [shape = 's32[2]{0}', space=sflag, size = 0x8, scoped, tag = 'scoped memory for tpu_custom_call.1']
    #allocation7 [shape = 'u8[16384]{0}', space=vmem, size = 0x4000, scoped, tag = 'input window, operand 2, single buffered']
    #allocation8 [shape = 'u8[16384]{0}', space=vmem, size = 0x4000, scoped, tag = 'input window, operand 3, single buffered']
    #allocation9 [shape = 's32[1]{0}', space=sflag, size = 0x4, scoped, tag = 'scoped memory for tpu_custom_call.1']
    #allocation10 [shape = 'u8[16384]{0}', space=vmem, size = 0x4000, scoped, tag = 'input window, operand 4, single buffered']
    #allocation11 [shape = 'u8[8192]{0}', space=vmem, size = 0x2000, scoped, tag = 'output window, operand 0']
    %11 = vsyncpa [#allocation3], 0
    %s12 = scalar_lea.sflag [#allocation3], 1
    %13 = vsyncpa %s12, 0
    %14 = vsyncpa [#allocation6], 0
    %s15 = scalar_lea.sflag [#allocation6], 1
    %16 = vsyncpa %s15, 0
    %17 = vsyncpa [#allocation9], 0
    %18 = vsyncpa [#allocation4], 0
    %s19 = scalar_lea.sflag [#allocation4], 1
    %20 = vsyncpa %s19, 0
    loop: start=0, step=1, limit=4
    $region2: #{tpu_custom_call.1} parent=1 // loop_pre_header
      _
    $region3: #{tpu_custom_call.1} parent=1 // loop_header
      %s22 = sphi 0, %s26
      %p23 = scmp.ge.s32.totalorder %s22, 4
      %s32 = sphi 0, %s34
      %s35 = sphi 0, %s32
      %s36 = sphi 0, %s35
      %s52 = sphi 0, %s36
      %s58 = sphi 0, %s60
      %s61 = sphi 0, %s58
      %s62 = sphi 0, %s61
      %s78 = sphi 0, %s62
      %s82 = sphi 0, %s82
      %s84 = sphi 0, %s82
      %s85 = sphi 0, %s84
      %s99 = sphi 0, %s85
      %s103 = sphi 0, %s103
      %s105 = sphi 0, %s103
      %s106 = sphi 0, %s105
      %s120 = sphi 0, %s106
      %s124 = sphi 0, %s124
      %s126 = sphi 0, %s124
      %s127 = sphi 0, %s126
      %s141 = sphi 0, %s127
      %s145 = sphi 0, %s145
      %s147 = sphi 0, %s145
      %s148 = sphi 0, %s147
      %s162 = sphi 0, %s148
      %s168 = sphi 0, %s170
      %s171 = sphi 0, %s168
      %s172 = sphi 0, %s171
      %s188 = sphi 0, %s172
    $region4: #{tpu_custom_call.1} parent=1 // loop_header_branch
      %25 = sbr.rel (%p23) target = $region8
    $region5: #{tpu_custom_call.1} parent=1 // loop_body
      %s27 = ssub.s32 %s22, 1
      %s28 = ssub.s32 %s22, 2
      %s29 = sadd.s32 %s22, 1
      %s30 = ssub.s32 %s22, %s29
      %p31 = scmp.eq.s32.totalorder %s30, 0
      %s33 = sadd.s32 %s32, 1
      %s34 = scalar_select %p31, %s32, %s33
      %p37 = pneg %p31
      %p38 = scmp.eq.s32.totalorder %s22, 1
      %p39 = por %p37, %p38
      %p40 = scmp.ne.s32.totalorder %s32, %s35
      %p41 = scmp.eq.s32.totalorder %s22, 0
      %p42 = por %p40, %p41
      %p43 = scmp.ne.s32.totalorder %s32, %s35
      %p44 = scmp.eq.s32.totalorder %s27, 1
      %p45 = por %p43, %p44
      %p46 = scmp.ne.s32.totalorder %s35, %s36
      %p47 = scmp.eq.s32.totalorder %s27, 0
      %p48 = por %p46, %p47
      %p49 = scmp.ne.s32.totalorder %s35, %s36
      %p50 = scmp.eq.s32.totalorder %s28, 1
      %p51 = por %p49, %p50
      %p53 = scmp.ne.s32.totalorder %s36, %s52
      %p54 = scmp.eq.s32.totalorder %s28, 0
      %p55 = por %p53, %p54
      %s56 = ssub.s32 %s22, %s29
      %p57 = scmp.eq.s32.totalorder %s56, 0
      %s59 = sadd.s32 %s58, 1
      %s60 = scalar_select %p57, %s58, %s59
      %p63 = pneg %p57
      %p64 = scmp.eq.s32.totalorder %s22, 1
      %p65 = por %p63, %p64
      %p66 = scmp.ne.s32.totalorder %s58, %s61
      %p67 = scmp.eq.s32.totalorder %s22, 0
      %p68 = por %p66, %p67
      %p69 = scmp.ne.s32.totalorder %s58, %s61
      %p70 = scmp.eq.s32.totalorder %s27, 1
      %p71 = por %p69, %p70
      %p72 = scmp.ne.s32.totalorder %s61, %s62
      %p73 = scmp.eq.s32.totalorder %s27, 0
      %p74 = por %p72, %p73
      %p75 = scmp.ne.s32.totalorder %s61, %s62
      %p76 = scmp.eq.s32.totalorder %s28, 1
      %p77 = por %p75, %p76
      %p79 = scmp.ne.s32.totalorder %s62, %s78
      %p80 = scmp.eq.s32.totalorder %s28, 0
      %p81 = por %p79, %p80
      %s83 = sadd.s32 %s82, 1
      %p86 = scmp.eq.s32.totalorder %s22, 1
      %p87 = scmp.ne.s32.totalorder %s82, %s84
      %p88 = scmp.eq.s32.totalorder %s22, 0
      %p89 = por %p87, %p88
      %p90 = scmp.ne.s32.totalorder %s82, %s84
      %p91 = scmp.eq.s32.totalorder %s27, 1
      %p92 = por %p90, %p91
      %p93 = scmp.ne.s32.totalorder %s84, %s85
      %p94 = scmp.eq.s32.totalorder %s27, 0
      %p95 = por %p93, %p94
      %p96 = scmp.ne.s32.totalorder %s84, %s85
      %p97 = scmp.eq.s32.totalorder %s28, 1
      %p98 = por %p96, %p97
      %p100 = scmp.ne.s32.totalorder %s85, %s99
      %p101 = scmp.eq.s32.totalorder %s28, 0
      %p102 = por %p100, %p101
      %s104 = sadd.s32 %s103, 1
      %p107 = scmp.eq.s32.totalorder %s22, 1
      %p108 = scmp.ne.s32.totalorder %s103, %s105
      %p109 = scmp.eq.s32.totalorder %s22, 0
      %p110 = por %p108, %p109
      %p111 = scmp.ne.s32.totalorder %s103, %s105
      %p112 = scmp.eq.s32.totalorder %s27, 1
      %p113 = por %p111, %p112
      %p114 = scmp.ne.s32.totalorder %s105, %s106
      %p115 = scmp.eq.s32.totalorder %s27, 0
      %p116 = por %p114, %p115
      %p117 = scmp.ne.s32.totalorder %s105, %s106
      %p118 = scmp.eq.s32.totalorder %s28, 1
      %p119 = por %p117, %p118
      %p121 = scmp.ne.s32.totalorder %s106, %s120
      %p122 = scmp.eq.s32.totalorder %s28, 0
      %p123 = por %p121, %p122
      %s125 = sadd.s32 %s124, 1
      %p128 = scmp.eq.s32.totalorder %s22, 1
      %p129 = scmp.ne.s32.totalorder %s124, %s126
      %p130 = scmp.eq.s32.totalorder %s22, 0
      %p131 = por %p129, %p130
      %p132 = scmp.ne.s32.totalorder %s124, %s126
      %p133 = scmp.eq.s32.totalorder %s27, 1
      %p134 = por %p132, %p133
      %p135 = scmp.ne.s32.totalorder %s126, %s127
      %p136 = scmp.eq.s32.totalorder %s27, 0
      %p137 = por %p135, %p136
      %p138 = scmp.ne.s32.totalorder %s126, %s127
      %p139 = scmp.eq.s32.totalorder %s28, 1
      %p140 = por %p138, %p139
      %p142 = scmp.ne.s32.totalorder %s127, %s141
      %p143 = scmp.eq.s32.totalorder %s28, 0
      %p144 = por %p142, %p143
      %s146 = sadd.s32 %s145, 1
      %p149 = scmp.eq.s32.totalorder %s22, 1
      %p150 = scmp.ne.s32.totalorder %s145, %s147
      %p151 = scmp.eq.s32.totalorder %s22, 0
      %p152 = por %p150, %p151
      %p153 = scmp.ne.s32.totalorder %s145, %s147
      %p154 = scmp.eq.s32.totalorder %s27, 1
      %p155 = por %p153, %p154
      %p156 = scmp.ne.s32.totalorder %s147, %s148
      %p157 = scmp.eq.s32.totalorder %s27, 0
      %p158 = por %p156, %p157
      %p159 = scmp.ne.s32.totalorder %s147, %s148
      %p160 = scmp.eq.s32.totalorder %s28, 1
      %p161 = por %p159, %p160
      %p163 = scmp.ne.s32.totalorder %s148, %s162
      %p164 = scmp.eq.s32.totalorder %s28, 0
      %p165 = por %p163, %p164
      %s166 = ssub.s32 %s22, %s29
      %p167 = scmp.eq.s32.totalorder %s166, 0
      %s169 = sadd.s32 %s168, 1
      %s170 = scalar_select %p167, %s168, %s169
      %p173 = pneg %p167
      %p174 = scmp.eq.s32.totalorder %s22, 1
      %p175 = por %p173, %p174
      %p176 = scmp.ne.s32.totalorder %s168, %s171
      %p177 = scmp.eq.s32.totalorder %s22, 0
      %p178 = por %p176, %p177
      %p179 = scmp.ne.s32.totalorder %s168, %s171
      %p180 = scmp.eq.s32.totalorder %s27, 1
      %p181 = por %p179, %p180
      %p182 = scmp.ne.s32.totalorder %s171, %s172
      %p183 = scmp.eq.s32.totalorder %s27, 0
      %p184 = por %p182, %p183
      %p185 = scmp.ne.s32.totalorder %s171, %s172
      %p186 = scmp.eq.s32.totalorder %s28, 1
      %p187 = por %p185, %p186
      %p189 = scmp.ne.s32.totalorder %s172, %s188
      %p190 = scmp.eq.s32.totalorder %s28, 0
      %p191 = por %p189, %p190
      %p192 = scmp.le.s32.totalorder 1, %s22
      %p193 = scmp.lt.s32.totalorder %s22, 3
      %p194 = pnand %p192, %p193
      %p195 = pneg %p194
      // Predicated region
      $region9: #{tpu_custom_call.1} parent=5 // pred_check
        _
      $region10: #{tpu_custom_call.1} parent=5 // pred_check_branch
        %197 = sbr.rel (%p194) target = $region12
      $region11: #{tpu_custom_call.1} parent=5 // pred_region
        %s198 = ssub.s32 %s22, 1
        // Predicated region
        $region13: #{tpu_custom_call.1} parent=11 // pred_check
          %p199 = pneg %p95
        $region14: #{tpu_custom_call.1} parent=11 // pred_check_branch
          %201 = sbr.rel (%p199) target = $region16
        $region15: #{tpu_custom_call.1} parent=11 // pred_region
          %203 = vsyncadd [#allocation6], 0
          %s204 = sshll.u32 %s2, 4
          %s205 = int_to_ptr.hbm [resolvable:$true] %s204
          %s206 = sshll.u32 [#allocation7], 4
          %s207 = int_to_ptr.vmem [resolvable:$true] %s206
          %212 = dma.hbm_to_vmem [thread:$0]  %s205, 512, %s207, [#allocation6], 128, 128, 8
        $region16: #{tpu_custom_call.1} parent=11 // pred_fallthru
          _
        // Predicated region
        $region17: #{tpu_custom_call.1} parent=11 // pred_check
          %p213 = pneg %p116
        $region18: #{tpu_custom_call.1} parent=11 // pred_check_branch
          %215 = sbr.rel (%p213) target = $region20
        $region19: #{tpu_custom_call.1} parent=11 // pred_region
          %217 = vsyncadd [#allocation9], 0
          %s218 = sshll.u32 %s3, 4
          %s219 = int_to_ptr.hbm [resolvable:$true] %s218
          %s220 = sshll.u32 [#allocation8], 4
          %s221 = int_to_ptr.vmem [resolvable:$true] %s220
          %226 = dma.hbm_to_vmem [thread:$0]  %s219, 512, %s221, [#allocation9], 128, 128, 8
        $region20: #{tpu_custom_call.1} parent=11 // pred_fallthru
          _
        // Predicated region
        $region21: #{tpu_custom_call.1} parent=11 // pred_check
          %p227 = pneg %p137
        $region22: #{tpu_custom_call.1} parent=11 // pred_check_branch
          %229 = sbr.rel (%p227) target = $region24
        $region23: #{tpu_custom_call.1} parent=11 // pred_region
          %231 = vsyncadd [#allocation9], 0
          %s232 = sshll.u32 %s4, 4
          %s233 = int_to_ptr.hbm [resolvable:$true] %s232
          %s234 = sshll.u32 [#allocation10], 4
          %s235 = int_to_ptr.vmem [resolvable:$true] %s234
          %240 = dma.hbm_to_vmem [thread:$0]  %s233, 512, %s235, [#allocation9], 128, 128, 8
        $region24: #{tpu_custom_call.1} parent=11 // pred_fallthru
          _
        // Predicated region
        $region25: #{tpu_custom_call.1} parent=11 // pred_check
          %p241 = pneg %p158
        $region26: #{tpu_custom_call.1} parent=11 // pred_check_branch
          %243 = sbr.rel (%p241) target = $region28
        $region27: #{tpu_custom_call.1} parent=11 // pred_region
          _
        $region28: #{tpu_custom_call.1} parent=11 // pred_fallthru
          _
      $region12: #{tpu_custom_call.1} parent=5 // pred_fallthru
        _
      %p244 = scmp.lt.s32.totalorder %s22, 2
      // Predicated region
      $region29: #{tpu_custom_call.1} parent=5 // pred_check
        %p245 = pneg %p244
      $region30: #{tpu_custom_call.1} parent=5 // pred_check_branch
        %247 = sbr.rel (%p245) target = $region32
      $region31: #{tpu_custom_call.1} parent=5 // pred_region
        // Predicated region
        $region33: #{tpu_custom_call.1} parent=31 // pred_check
          %p248 = pneg %p42
        $region34: #{tpu_custom_call.1} parent=31 // pred_check_branch
          %250 = sbr.rel (%p248) target = $region36
        $region35: #{tpu_custom_call.1} parent=31 // pred_region
          %s251 = sand.u32 %s32, 1
          %s252 = scalar_lea.sflag [#allocation3], %s251
          %s253 = sand.u32 %s32, 1
          %s254 = smul.addr %s253, 8
          %s255 = scalar_lea.vmem [#allocation2], %s254
          %257 = vsyncadd %s252, 0
          %s258 = smul.addr %s22, 8
          %s259 = scalar_lea.hbm %s0, %s258
          %s261 = sshll.u32 %s259, 4
          %s262 = int_to_ptr.hbm [resolvable:$true] %s261
          %s263 = sshll.u32 %s255, 4
          %s264 = int_to_ptr.vmem [resolvable:$true] %s263
          %266 = dma.hbm_to_vmem [thread:$0]  %s262, 128, %s264, %s252
        $region36: #{tpu_custom_call.1} parent=31 // pred_fallthru
          _
        // Predicated region
        $region37: #{tpu_custom_call.1} parent=31 // pred_check
          %p267 = pneg %p68
        $region38: #{tpu_custom_call.1} parent=31 // pred_check_branch
          %269 = sbr.rel (%p267) target = $region40
        $region39: #{tpu_custom_call.1} parent=31 // pred_region
          %s270 = sand.u32 %s22, 1
          %s271 = scalar_lea.sflag [#allocation6], %s270
          %s272 = sand.u32 %s58, 1
          %s273 = smul.addr %s272, 8
          %s274 = scalar_lea.vmem [#allocation5], %s273
          %276 = vsyncadd %s271, 0
          %s277 = smul.addr %s22, 8
          %s278 = scalar_lea.hbm %s1, %s277
          %s280 = sshll.u32 %s278, 4
          %s281 = int_to_ptr.hbm [resolvable:$true] %s280
          %s282 = sshll.u32 %s274, 4
          %s283 = int_to_ptr.vmem [resolvable:$true] %s282
          %285 = dma.hbm_to_vmem [thread:$0]  %s281, 128, %s283, %s271
        $region40: #{tpu_custom_call.1} parent=31 // pred_fallthru
          _
      $region32: #{tpu_custom_call.1} parent=5 // pred_fallthru
        _
      %p286 = scmp.le.s32.totalorder 1, %s22
      %p287 = scmp.lt.s32.totalorder %s22, 3
      %p288 = pnand %p286, %p287
      %p289 = pneg %p288
      // Predicated region
      $region41: #{tpu_custom_call.1} parent=5 // pred_check
        _
      $region42: #{tpu_custom_call.1} parent=5 // pred_check_branch
        %291 = sbr.rel (%p288) target = $region44
      $region43: #{tpu_custom_call.1} parent=5 // pred_region
        %s292 = ssub.s32 %s22, 1
        %s293 = sand.u32 %s35, 1
        %s294 = scalar_lea.sflag [#allocation3], %s293
        %s295 = sand.u32 %s35, 1
        %s296 = smul.addr %s295, 8
        %s297 = scalar_lea.vmem [#allocation2], %s296
        // Predicated region
        $region45: #{tpu_custom_call.1} parent=43 // pred_check
          %p298 = pneg %p48
        $region46: #{tpu_custom_call.1} parent=43 // pred_check_branch
          %300 = sbr.rel (%p298) target = $region48
        $region47: #{tpu_custom_call.1} parent=43 // pred_region
          %302 = dma.done %s294, 128
        $region48: #{tpu_custom_call.1} parent=43 // pred_fallthru
          _
        %s303 = sand.u32 %s27, 1
        %s304 = scalar_lea.sflag [#allocation6], %s303
        %s305 = sand.u32 %s61, 1
        %s306 = smul.addr %s305, 8
        %s307 = scalar_lea.vmem [#allocation5], %s306
        // Predicated region
        $region49: #{tpu_custom_call.1} parent=43 // pred_check
          %p308 = pneg %p74
        $region50: #{tpu_custom_call.1} parent=43 // pred_check_branch
          %310 = sbr.rel (%p308) target = $region52
        $region51: #{tpu_custom_call.1} parent=43 // pred_region
          %312 = dma.done %s304, 128
        $region52: #{tpu_custom_call.1} parent=43 // pred_fallthru
          _
        // Predicated region
        $region53: #{tpu_custom_call.1} parent=43 // pred_check
          %p313 = pneg %p95
        $region54: #{tpu_custom_call.1} parent=43 // pred_check_branch
          %315 = sbr.rel (%p313) target = $region56
        $region55: #{tpu_custom_call.1} parent=43 // pred_region
          %317 = dma.done [#allocation6], 512
        $region56: #{tpu_custom_call.1} parent=43 // pred_fallthru
          _
        // Predicated region
        $region57: #{tpu_custom_call.1} parent=43 // pred_check
          %p318 = pneg %p116
        $region58: #{tpu_custom_call.1} parent=43 // pred_check_branch
          %320 = sbr.rel (%p318) target = $region60
        $region59: #{tpu_custom_call.1} parent=43 // pred_region
          %322 = dma.done [#allocation9], 512
        $region60: #{tpu_custom_call.1} parent=43 // pred_fallthru
          _
        // Predicated region
        $region61: #{tpu_custom_call.1} parent=43 // pred_check
          %p323 = pneg %p137
        $region62: #{tpu_custom_call.1} parent=43 // pred_check_branch
          %325 = sbr.rel (%p323) target = $region64
        $region63: #{tpu_custom_call.1} parent=43 // pred_region
          %327 = dma.done [#allocation9], 512
        $region64: #{tpu_custom_call.1} parent=43 // pred_fallthru
          _
        %s328 = sand.u32 %s35, 1
        %s329 = scalar_lea.sflag [#allocation3], %s328
        %s330 = sand.u32 %s35, 1
        %s331 = smul.addr %s330, 8
        %s332 = scalar_lea.vmem [#allocation2], %s331
        %p333 = pneg %p48
        %p334 = pneg %p45
        %s335 = sand.u32 %s27, 1
        %s336 = scalar_lea.sflag [#allocation6], %s335
        %s337 = sand.u32 %s61, 1
        %s338 = smul.addr %s337, 8
        %s339 = scalar_lea.vmem [#allocation5], %s338
        %p340 = pneg %p74
        %p341 = pneg %p71
        %p342 = pneg %p95
        %p343 = pneg %p92
        %p344 = pneg %p116
        %p345 = pneg %p113
        %p346 = pneg %p137
        %p347 = pneg %p134
        %p348 = pneg %p158
        %p349 = pneg %p155
        %p350 = pneg %p184
        %p351 = pneg %p181
        %s352 = sand.u32 %s171, 1
        %s353 = scalar_lea.sflag [#allocation4], %s352
        %s354 = sand.u32 %s171, 1
        %s355 = smul.addr %s354, 8
        %s356 = scalar_lea.vmem [#allocation11], %s355
        %v357 = vld [vmem:[%s297] sm:$0xff]
        %v358 = vld [vmem:[%s307] sm:$0xff]
        %v359 = vld [vmem:[#allocation7] sm:$0xff]
        %v360 = vld [vmem:[#allocation7 + $0x8] sm:$0xff]
        %v361 = vld [vmem:[#allocation7 + $0x10] sm:$0xff]
        %v362 = vld [vmem:[#allocation7 + $0x18] sm:$0xff]
        %vm363 = vcmask 261120
        %v365 = vsel %vm363, %v357, 0
        %367 = vmatpush.msra.mxu0 0.0
        %368 = vmatpush.msra.mxu0 0.0
        %369 = vmatpush.msra.mxu0 0.0
        %370 = vmatpush.msra.mxu0 0.0
        %371 = vmatpush.msra.mxu0 0.0
        %372 = vmatpush.msra.mxu0 0.0
        %373 = vmatpush.msra.mxu0 0.0
        %374 = vmatpush.msra.mxu0 0.0
        %375 = vmatpush.msra.mxu0 0.0
        %376 = vmatpush.msra.mxu0 0.0
        %377 = vmatpush.msra.mxu0 0.0
        %378 = vmatpush.msra.mxu0 0.0
        %379 = vmatpush.msra.mxu0 %v362
        %380 = vmatpush.msra.mxu0 %v361
        %381 = vmatpush.msra.mxu0 %v360
        %382 = vmatpush.msra.mxu0 %v359
        %383 = vmatmul.f32.gmra.mxu0 %v365
        %v384 = vpop.f32.mrf.mxu0
        %v385 = vadd.f32 0.0, %v384
        %386 = vdwg.mxu0
        %v387 = vsub.f32 %v357, %v358
        %v388 = vld [vmem:[#allocation8] sm:$0xff]
        %v389 = vld [vmem:[#allocation8 + $0x8] sm:$0xff]
        %v390 = vld [vmem:[#allocation8 + $0x10] sm:$0xff]
        %v391 = vld [vmem:[#allocation8 + $0x18] sm:$0xff]
        %v393 = vsel %vm363, %v387, 0
        %395 = vmatpush.msra.mxu0 0.0
        %396 = vmatpush.msra.mxu0 0.0
        %397 = vmatpush.msra.mxu0 0.0
        %398 = vmatpush.msra.mxu0 0.0
        %399 = vmatpush.msra.mxu0 0.0
        %400 = vmatpush.msra.mxu0 0.0
        %401 = vmatpush.msra.mxu0 0.0
        %402 = vmatpush.msra.mxu0 0.0
        %403 = vmatpush.msra.mxu0 0.0
        %404 = vmatpush.msra.mxu0 0.0
        %405 = vmatpush.msra.mxu0 0.0
        %406 = vmatpush.msra.mxu0 0.0
        %407 = vmatpush.msra.mxu0 %v391
        %408 = vmatpush.msra.mxu0 %v390
        %409 = vmatpush.msra.mxu0 %v389
        %410 = vmatpush.msra.mxu0 %v388
        %411 = vmatmul.f32.gmra.mxu0 %v393
        %v412 = vpop.f32.mrf.mxu0
        %v413 = vadd.f32 0.0, %v412
        %414 = vdwg.mxu0
        %v415 = vld [vmem:[#allocation10] sm:$0xff]
        %v416 = vld [vmem:[#allocation10 + $0x8] sm:$0xff]
        %v417 = vld [vmem:[#allocation10 + $0x10] sm:$0xff]
        %v418 = vld [vmem:[#allocation10 + $0x18] sm:$0xff]
        %v419 = vld [vmem:[%s5] sm:$0x1]
        %vm420 = vcmask 130048
        %v422 = vsel %vm420, %v385, 0
        %v425 = vsel %vm420, %v413, 0
        %427 = vmatpush.xpose.msra.mxu0 0.0
        %428 = vmatpush.xpose.msra.mxu0 0.0
        %429 = vmatpush.xpose.msra.mxu0 0.0
        %430 = vmatpush.xpose.msra.mxu0 0.0
        %431 = vmatpush.xpose.msra.mxu0 0.0
        %432 = vmatpush.xpose.msra.mxu0 0.0
        %433 = vmatpush.xpose.msra.mxu0 0.0
        %434 = vmatpush.xpose.msra.mxu0 0.0
        %435 = vmatpush.xpose.msra.mxu0 0.0
        %436 = vmatpush.xpose.msra.mxu0 0.0
        %437 = vmatpush.xpose.msra.mxu0 0.0
        %438 = vmatpush.xpose.msra.mxu0 0.0
        %439 = vmatpush.xpose.msra.mxu0 0.0
        %440 = vmatpush.xpose.msra.mxu0 0.0
        %441 = vmatpush.xpose.msra.mxu0 0.0
        %442 = vmatpush.xpose.msra.mxu0 %v425
        %443 = vmatmul.f32.gmra.mxu0 %v422
        %v444 = vpop.f32.mrf.mxu0
        %v445 = vadd.f32 0.0, %v444
        %446 = vdwg.mxu0
        %v447 = vmul.f32 %v445, %v445
        %v448 = vmul.f32 %v447, 0.17677669
        %vm449 = vcmask 64512
        %v450 = vsel %vm449, %v448, -inf
        %451 = vmax.xlane.f32.xlu0 %v450
        %v452 = vpop.xlane.xlu0 %451
        %v453 = vsub.f32 %v448, %v452
        %v454 = vmul.f32 %v453, 1.442695
        %v455 = vpow.pop %v454
        %v456 = vsel %vm449, %v455, 0.0
        %457 = vadd.xlane.f32.xlu0 %v456
        %v458 = vpop.xlane.xlu0 %457
        %v459 = vrcp.pop %v458
        %460 = vrot.lane.b32.xlu0 %v385, 96
        %v461 = vpop.permute.xlu0 %460
        %v464 = vsel %vm449, %v455, 0
        %466 = vmatpush.msra.mxu0 0.0
        %467 = vmatpush.msra.mxu0 0.0
        %468 = vmatpush.msra.mxu0 0.0
        %469 = vmatpush.msra.mxu0 0.0
        %470 = vmatpush.msra.mxu0 0.0
        %471 = vmatpush.msra.mxu0 0.0
        %472 = vmatpush.msra.mxu0 0.0
        %473 = vmatpush.msra.mxu0 0.0
        %474 = vmatpush.msra.mxu0 0.0
        %475 = vmatpush.msra.mxu0 0.0
        %476 = vmatpush.msra.mxu0 0.0
        %477 = vmatpush.msra.mxu0 0.0
        %478 = vmatpush.msra.mxu0 0.0
        %479 = vmatpush.msra.mxu0 0.0
        %480 = vmatpush.msra.mxu0 0.0
        %481 = vmatpush.msra.mxu0 %v461
        %482 = vmatmul.f32.gmra.mxu0 %v464
        %v483 = vpop.f32.mrf.mxu0
        %v484 = vadd.f32 0.0, %v483
        %485 = vdwg.mxu0
        %v486 = vmul.f32 %v484, %v459
        %v488 = vsel %vm420, %v486, 0
        %490 = vmatpush.msra.mxu0 0.0
        %491 = vmatpush.msra.mxu0 0.0
        %492 = vmatpush.msra.mxu0 0.0
        %493 = vmatpush.msra.mxu0 0.0
        %494 = vmatpush.msra.mxu0 0.0
        %495 = vmatpush.msra.mxu0 0.0
        %496 = vmatpush.msra.mxu0 0.0
        %497 = vmatpush.msra.mxu0 0.0
        %498 = vmatpush.msra.mxu0 0.0
        %499 = vmatpush.msra.mxu0 0.0
        %500 = vmatpush.msra.mxu0 0.0
        %501 = vmatpush.msra.mxu0 0.0
        %502 = vmatpush.msra.mxu0 0.0
        %503 = vmatpush.msra.mxu0 0.0
        %504 = vmatpush.msra.mxu0 %v416
        %505 = vmatpush.msra.mxu0 %v415
        %506 = vmatmul.f32.gmra.mxu0 %v488
        %v507 = vpop.f32.mrf.mxu0
        %v508 = vadd.f32 0.0, %v507
        %509 = vdwg.mxu0
        %v511 = vperm.slane %v419, 0
        %v513 = vadd.f32 %v511, %v508
        %514 = vrot.lane.b32.xlu0 %v385, 112
        %v515 = vpop.permute.xlu0 %514
        %516 = vrot.lane.b32.xlu0 %v413, 112
        %v517 = vpop.permute.xlu0 %516
        %v518 = vsel %vm420, %v515, 0
        %v520 = vsel %vm420, %v517, 0
        %522 = vmatpush.xpose.msra.mxu0 0.0
        %523 = vmatpush.xpose.msra.mxu0 0.0
        %524 = vmatpush.xpose.msra.mxu0 0.0
        %525 = vmatpush.xpose.msra.mxu0 0.0
        %526 = vmatpush.xpose.msra.mxu0 0.0
        %527 = vmatpush.xpose.msra.mxu0 0.0
        %528 = vmatpush.xpose.msra.mxu0 0.0
        %529 = vmatpush.xpose.msra.mxu0 0.0
        %530 = vmatpush.xpose.msra.mxu0 0.0
        %531 = vmatpush.xpose.msra.mxu0 0.0
        %532 = vmatpush.xpose.msra.mxu0 0.0
        %533 = vmatpush.xpose.msra.mxu0 0.0
        %534 = vmatpush.xpose.msra.mxu0 0.0
        %535 = vmatpush.xpose.msra.mxu0 0.0
        %536 = vmatpush.xpose.msra.mxu0 0.0
        %537 = vmatpush.xpose.msra.mxu0 %v520
        %538 = vmatmul.f32.gmra.mxu0 %v518
        %v539 = vpop.f32.mrf.mxu0
        %v540 = vadd.f32 0.0, %v539
        %541 = vdwg.mxu0
        %v542 = vmul.f32 %v540, %v540
        %v543 = vmul.f32 %v542, 0.17677669
        %v544 = vsel %vm449, %v543, -inf
        %545 = vmax.xlane.f32.xlu0 %v544
        %v546 = vpop.xlane.xlu0 %545
        %v547 = vsub.f32 %v543, %v546
        %v548 = vmul.f32 %v547, 1.442695
        %v549 = vpow.pop %v548
        %v550 = vsel %vm449, %v549, 0.0
        %551 = vadd.xlane.f32.xlu0 %v550
        %v552 = vpop.xlane.xlu0 %551
        %v553 = vrcp.pop %v552
        %554 = vrot.lane.b32.xlu0 %v385, 80
        %v555 = vpop.permute.xlu0 %554
        %v558 = vsel %vm449, %v549, 0
        %560 = vmatpush.msra.mxu0 0.0
        %561 = vmatpush.msra.mxu0 0.0
        %562 = vmatpush.msra.mxu0 0.0
        %563 = vmatpush.msra.mxu0 0.0
        %564 = vmatpush.msra.mxu0 0.0
        %565 = vmatpush.msra.mxu0 0.0
        %566 = vmatpush.msra.mxu0 0.0
        %567 = vmatpush.msra.mxu0 0.0
        %568 = vmatpush.msra.mxu0 0.0
        %569 = vmatpush.msra.mxu0 0.0
        %570 = vmatpush.msra.mxu0 0.0
        %571 = vmatpush.msra.mxu0 0.0
        %572 = vmatpush.msra.mxu0 0.0
        %573 = vmatpush.msra.mxu0 0.0
        %574 = vmatpush.msra.mxu0 0.0
        %575 = vmatpush.msra.mxu0 %v555
        %576 = vmatmul.f32.gmra.mxu0 %v558
        %v577 = vpop.f32.mrf.mxu0
        %v578 = vadd.f32 0.0, %v577
        %579 = vdwg.mxu0
        %v580 = vmul.f32 %v578, %v553
        %v582 = vsel %vm420, %v580, 0
        %584 = vmatpush.msra.mxu0 0.0
        %585 = vmatpush.msra.mxu0 0.0
        %586 = vmatpush.msra.mxu0 0.0
        %587 = vmatpush.msra.mxu0 0.0
        %588 = vmatpush.msra.mxu0 0.0
        %589 = vmatpush.msra.mxu0 0.0
        %590 = vmatpush.msra.mxu0 0.0
        %591 = vmatpush.msra.mxu0 0.0
        %592 = vmatpush.msra.mxu0 0.0
        %593 = vmatpush.msra.mxu0 0.0
        %594 = vmatpush.msra.mxu0 0.0
        %595 = vmatpush.msra.mxu0 0.0
        %596 = vmatpush.msra.mxu0 0.0
        %597 = vmatpush.msra.mxu0 0.0
        %598 = vmatpush.msra.mxu0 %v418
        %599 = vmatpush.msra.mxu0 %v417
        %600 = vmatmul.f32.gmra.mxu0 %v582
        %v601 = vpop.f32.mrf.mxu0
        %v602 = vadd.f32 0.0, %v601
        %603 = vdwg.mxu0
        %v604 = vadd.f32 %v513, %v602
        %605 = vst.msk [vmem:[%s356] sm:$0xff] %vm363, %v604
        %s606 = sand.u32 %s171, 1
        %s607 = scalar_lea.sflag [#allocation4], %s606
        %s608 = sand.u32 %s171, 1
        %s609 = smul.addr %s608, 8
        %s610 = scalar_lea.vmem [#allocation11], %s609
        // Predicated region
        $region65: #{tpu_custom_call.1} parent=43 // pred_check
          %p611 = pneg %p181
        $region66: #{tpu_custom_call.1} parent=43 // pred_check_branch
          %613 = sbr.rel (%p611) target = $region68
        $region67: #{tpu_custom_call.1} parent=43 // pred_region
          %615 = vsyncadd %s607, 0
          %s616 = smul.addr %s27, 8
          %s617 = scalar_lea.hbm %s6, %s616
          %s619 = sshll.u32 %s610, 4
          %s620 = int_to_ptr.vmem [resolvable:$true] %s619
          %s621 = sshll.u32 %s617, 4
          %s622 = int_to_ptr.hbm [resolvable:$true] %s621
          %624 = dma.vmem_to_hbm [thread:$0]  %s620, 128, %s622, %s607
        $region68: #{tpu_custom_call.1} parent=43 // pred_fallthru
          _
      $region44: #{tpu_custom_call.1} parent=5 // pred_fallthru
        _
      %p625 = scmp.le.s32.totalorder 2, %s22
      // Predicated region
      $region69: #{tpu_custom_call.1} parent=5 // pred_check
        %p626 = pneg %p625
      $region70: #{tpu_custom_call.1} parent=5 // pred_check_branch
        %628 = sbr.rel (%p626) target = $region72
      $region71: #{tpu_custom_call.1} parent=5 // pred_region
        %s629 = ssub.s32 %s22, 2
        // Predicated region
        $region73: #{tpu_custom_call.1} parent=71 // pred_check
          %p630 = pneg %p187
        $region74: #{tpu_custom_call.1} parent=71 // pred_check_branch
          %632 = sbr.rel (%p630) target = $region76
        $region75: #{tpu_custom_call.1} parent=71 // pred_region
          %s633 = sand.u32 %s172, 1
          %s634 = scalar_lea.sflag [#allocation4], %s633
          %s635 = sand.u32 %s172, 1
          %s636 = smul.addr %s635, 8
          %s637 = scalar_lea.vmem [#allocation11], %s636
          %639 = dma.done %s634, 128
        $region76: #{tpu_custom_call.1} parent=71 // pred_fallthru
          _
      $region72: #{tpu_custom_call.1} parent=5 // pred_fallthru
        _
    $region6: #{tpu_custom_call.1} parent=1 // loop_footer
      %s26 = sadd.s32 1, %s22
    $region7: #{tpu_custom_call.1} parent=1 // loop_footer_branch
      %21 = sbr.rel target = $region3
    $region8: #{tpu_custom_call.1} parent=1 // loop_exit
      _
    %640 = vsyncpa [#allocation3], 1
    %s641 = scalar_lea.sflag [#allocation3], 1
    %642 = vsyncpa %s641, 1
    %643 = vsyncpa [#allocation6], 1
    %s644 = scalar_lea.sflag [#allocation6], 1
    %645 = vsyncpa %s644, 1
    %646 = vsyncpa [#allocation9], 1
    %647 = vsyncpa [#allocation4], 1
    %s648 = scalar_lea.sflag [#allocation4], 1
    %649 = vsyncpa %s648, 1

</llo_original>
